<compile_context>
chip_gen: v7x
topology: tpu7x:2x2x1
jax: 0.10.0
libtpu: 0.0.40
codegen_flags: <defaults>
</compile_context>

<pallas_src>
import functools

import jax
import jax.numpy as jnp
from jax import lax
from jax.experimental import pallas as pl
from jax.experimental.pallas import tpu as pltpu

_MAX_TILE_LANES = 16384   # lanes per grid step; ~10.5 MiB double-buffered inputs
_CHUNK_LANES = 256        # lanes per inner compute chunk (keeps vreg pressure low)


def _cdiv(a, b):
    return -(-a // b)


def _round_up(a, b):
    return _cdiv(a, b) * b


def _yolo_loss_kernel(anch_ref, p_ref, t_ref, out_ref, acc_ref, *,
                      tile_lanes, chunk_lanes):
    """One (half, anchor, cell-block) grid step.

    anch_ref: SMEM (12,) f32 = [aw, ah, 1/aw, 1/ah] per anchor.
    p_ref / t_ref: VMEM (40, tile_lanes); channel c lives in rows [8c, 8c+8).
    out_ref: VMEM (8, 128); rows 0..3 carry (noobj BCE sum, noobj count,
      obj count, obj+0.25*box MSE sum) broadcast over lanes; written only at
      the last reduction step.
    acc_ref: VMEM (32, chunk_lanes) scratch accumulator, persistent across the
      reduction axis; one read-modify-write per grid step.
    """
    a = pl.program_id(1)      # anchor index (parallel axis)
    j = pl.program_id(2)      # cell-block index (reduction axis)

    @pl.when(j == 0)
    def _init():
        acc_ref[...] = jnp.zeros_like(acc_ref)

    base = 4 * a
    aw = anch_ref[base]
    ah = anch_ref[base + 1]
    inv_aw = anch_ref[base + 2]
    inv_ah = anch_ref[base + 3]

    # Loop-invariant anchor splats hoisted out of the chunk loop (JAX does not
    # CSE broadcast_in_dim across fori_loop iterations).
    shp = (8, chunk_lanes)
    aw_b = jnp.full(shp, aw, jnp.float32)
    ah_b = jnp.full(shp, ah, jnp.float32)
    inv_aw_b = jnp.full(shp, inv_aw, jnp.float32)
    inv_ah_b = jnp.full(shp, inv_ah, jnp.float32)

    n_chunks = tile_lanes // chunk_lanes

    def sig(v):  # sigmoid on the EUP tanh path (for p1/p2): no exp, no divide
        return 0.5 * (1.0 + jnp.tanh(0.5 * v))

    def chunk_body(ci, carry):
        c_bce, c_ncnt, c_ocnt, c_obox = carry
        start = pl.multiple_of(ci * chunk_lanes, chunk_lanes)
        sl = pl.ds(start, chunk_lanes)

        p0 = p_ref[0:8, sl]
        p1 = p_ref[8:16, sl]
        p2 = p_ref[16:24, sl]
        p3 = p_ref[24:32, sl]
        p4 = p_ref[32:40, sl]
        t0 = t_ref[0:8, sl]
        t1 = t_ref[8:16, sl]
        t2 = t_ref[16:24, sl]
        t3 = t_ref[24:32, sl]
        t4 = t_ref[32:40, sl]

        # Padded cells carry the sentinel t0 == -1: neither obj (t0==1) nor
        # noobj (t0==0), so no validity iota/compare is needed.
        objf = (t0 == 1.0).astype(jnp.float32)
        noobjf = (t0 == 0.0).astype(jnp.float32)

        # --- no-object loss: BCE-with-logits vs. zero target == softplus(p0)
        e = jnp.exp(-jnp.abs(p0))
        one_plus_e = 1.0 + e
        bce = jnp.maximum(p0, 0.0) + jnp.log(one_plus_e)

        # sigmoid(p0) reuses e from the BCE (no extra tanh/exp):
        #   p0 >= 0: 1/(1+e) ; p0 < 0: e/(1+e)
        r = pl.reciprocal(one_plus_e, approx=True)
        sig_p0 = jnp.where(p0 >= 0.0, r, e * r)

        # --- IoU(pred box, target box), midpoint format
        sig_p1 = sig(p1)
        sig_p2 = sig(p2)
        bw = jnp.exp(p3) * aw_b
        bh = jnp.exp(p4) * ah_b
        b1x1 = sig_p1 - 0.5 * bw
        b1x2 = sig_p1 + 0.5 * bw
        b1y1 = sig_p2 - 0.5 * bh
        b1y2 = sig_p2 + 0.5 * bh
        b2x1 = t1 - 0.5 * t3
        b2x2 = t1 + 0.5 * t3
        b2y1 = t2 - 0.5 * t4
        b2y2 = t2 + 0.5 * t4
        iw = jnp.maximum(jnp.minimum(b1x2, b2x2) - jnp.maximum(b1x1, b2x1), 0.0)
        ih = jnp.maximum(jnp.minimum(b1y2, b2y2) - jnp.maximum(b1y1, b2y1), 0.0)
        inter = iw * ih
        union = jnp.abs(bw * bh) + jnp.abs(t3 * t4) - inter + 1e-6
        iou = inter * pl.reciprocal(union, approx=True)

        # --- objectness MSE (obj cells have t0 == 1, so iou * t0 == iou)
        obj_sq = (sig_p0 - iou) ** 2

        # --- box MSE (keep 1e-16 *inside* the log; t3,t4 >= 0 where used)
        tw_tgt = jnp.log(1e-16 + t3 * inv_aw_b)
        th_tgt = jnp.log(1e-16 + t4 * inv_ah_b)
        box_sq = ((sig_p1 - t1) ** 2 + (sig_p2 - t2) ** 2 +
                  (p3 - tw_tgt) ** 2 + (p4 - th_tgt) ** 2)

        # --- masked accumulation into fori-carried vregs (no VMEM RMW here)
        return (c_bce + bce * noobjf,
                c_ncnt + noobjf,
                c_ocnt + objf,
                c_obox + (obj_sq + 0.25 * box_sq) * objf)

    zero = jnp.zeros(shp, jnp.float32)
    c_bce, c_ncnt, c_ocnt, c_obox = lax.fori_loop(
        0, n_chunks, chunk_body, (zero, zero, zero, zero))

    # One accumulator read-modify-write per grid step (not per chunk).
    acc_ref[0:8, :] += c_bce
    acc_ref[8:16, :] += c_ncnt
    acc_ref[16:24, :] += c_ocnt
    acc_ref[24:32, :] += c_obox

    @pl.when(j == pl.num_programs(2) - 1)
    def _finalize():
        # XLU is idle (no MXU work, VALU/EUP bound): reduce in-kernel and emit
        # a tiny lane-dense (8, 128) output instead of a big partial-sum slab.
        s_bce = jnp.sum(acc_ref[0:8, :])
        s_ncnt = jnp.sum(acc_ref[8:16, :])
        s_ocnt = jnp.sum(acc_ref[16:24, :])
        s_obox = jnp.sum(acc_ref[24:32, :])
        row = lax.broadcasted_iota(jnp.int32, (8, 128), 0)
        out_ref[...] = jnp.where(
            row == 0, s_bce,
            jnp.where(row == 1, s_ncnt,
                      jnp.where(row == 2, s_ocnt,
                                jnp.where(row == 3, s_obox, 0.0))))


@jax.jit
def yolo_loss(predictions, target, anchors):
    """Pallas-backed equivalent of YOLOLoss.forward (returns a scalar)."""
    # TODO(synk): the torch module also mutates `predictions`/`target` in place;
    # that side effect is not replicated here (only the returned loss is).
    B, A, S, S2, C = predictions.shape
    assert A == 3 and S == S2 and C >= 5
    M = B * S * S                      # cells per anchor

    # Lane axis layout: 2 halves (even megacore split on v7x) x n_half
    # reduction blocks x TL lanes; each grid step streams a (40, TL) tile.
    L = _cdiv(M, 8)                    # lanes needed per anchor
    half_L = _cdiv(L, 2)
    n_half = max(1, _cdiv(half_L, _MAX_TILE_LANES))
    tl_raw = _cdiv(half_L, n_half)
    if tl_raw >= _CHUNK_LANES:
        TL = min(_MAX_TILE_LANES, _round_up(tl_raw, _CHUNK_LANES))
        CL = _CHUNK_LANES
    else:
        TL = max(128, _round_up(tl_raw, 128))
        CL = TL
    Lp = 2 * n_half * TL
    Mp = 8 * Lp

    # Single relayout pass per input:
    # (B,3,S,S,C) -> (3,5,B*S*S) -> pad -> (3,40,Lp); channel c of anchor a
    # becomes the dense sublane x lane slab rows [8c, 8c+8) of slice a.
    # (Keep the [..., :5] slice first so class channels never move; on v5e the
    #  relayout HBM passes are the dominant wrapper cost.)
    def relayout(x, sentinel_pad_obj):
        x = jnp.transpose(x[..., :5].astype(jnp.float32), (1, 4, 0, 2, 3))
        x = x.reshape(3, 5, M)
        x = jnp.pad(x, ((0, 0), (0, 0), (0, Mp - M)))
        if sentinel_pad_obj and Mp > M:
            # Only the objectness channel gets the -1 sentinel; box channels
            # stay zero-padded so the masked log/exp terms remain finite.
            x = x.at[:, 0, M:].set(-1.0)
        return x.reshape(3, 40, Lp)

    p = relayout(predictions, False)   # predictions stay finite (zero) padded
    t = relayout(target, True)

    # Anchors never hit HBM as vector data: 12 scalars via scalar prefetch.
    anchors = anchors.astype(jnp.float32)
    anch = jnp.stack(
        [anchors[:, 0], anchors[:, 1], 1.0 / anchors[:, 0], 1.0 / anchors[:, 1]],
        axis=-1).reshape(-1)                                    # (12,)

    kernel = functools.partial(_yolo_loss_kernel, tile_lanes=TL, chunk_lanes=CL)

    # VMEM: 2 inputs x 2 buffers x 40*TL*4B (~10.5 MiB at TL=16384) + tiny
    # (32, CL) scratch and (8, 128) output blocks.
    acc = pl.pallas_call(
        kernel,
        out_shape=jax.ShapeDtypeStruct((2, 3, 8, 128), jnp.float32),
        grid_spec=pltpu.PrefetchScalarGridSpec(
            num_scalar_prefetch=1,
            grid=(2, 3, n_half),
            in_specs=[
                pl.BlockSpec((None, 40, TL),
                             lambda h, a, j, anch: (a, 0, h * n_half + j)),
                pl.BlockSpec((None, 40, TL),
                             lambda h, a, j, anch: (a, 0, h * n_half + j)),
            ],
            out_specs=pl.BlockSpec((None, None, 8, 128),
                                   lambda h, a, j, anch: (h, a, 0, 0)),
            scratch_shapes=[pltpu.VMEM((32, CL), jnp.float32)],
        ),
        compiler_params=pltpu.CompilerParams(
            # (halves, anchors) parallel -> even 3:3 split on v7x's two TCs;
            # the block axis is the reduction with a VMEM-resident scratch.
            dimension_semantics=("parallel", "parallel", "arbitrary"),
            vmem_limit_bytes=32 * 1024 * 1024),
    )(anch, p, t)

    # Each (half, anchor) output row r in 0..3 holds its sum broadcast over
    # the 128 lanes; take lane 0 and sum the 6 partials.
    sums = jnp.sum(acc[:, :, 0:4, 0], axis=(0, 1))              # (4,)
    noobj_sum, noobj_cnt = sums[0], sums[1]
    obj_cnt, obj_box_sum = sums[2], sums[3]

    # Means / NaN handling: torch zeroes object/box loss when there are no obj
    # cells; no_object_loss keeps torch's 0/0 -> NaN behavior.
    no_object_loss = noobj_sum / noobj_cnt
    obj_plus_box = jnp.where(obj_cnt > 0, obj_box_sum / obj_cnt, 0.0)
    return no_object_loss + obj_plus_box


def _reference_loss(predictions, target, anchors):
    """Pure-JAX replica of the PyTorch forward for validation."""
    predictions = predictions.astype(jnp.float32)
    target = target.astype(jnp.float32)
    anchors = anchors.astype(jnp.float32)

    def sig(v):
        return 1.0 / (1.0 + jnp.exp(-v))

    objf = (target[..., 0] == 1.0).astype(jnp.float32)
    noobjf = (target[..., 0] == 0.0).astype(jnp.float32)

    x = predictions[..., 0]
    y = target[..., 0]
    bce = jnp.maximum(x, 0.0) - x * y + jnp.log(1.0 + jnp.exp(-jnp.abs(x)))
    no_object_loss = jnp.sum(bce * noobjf) / jnp.sum(noobjf)

    anc = anchors.reshape(1, 3, 1, 1, 2)
    bx = sig(predictions[..., 1])
    by = sig(predictions[..., 2])
    bw = jnp.exp(predictions[..., 3]) * anc[..., 0]
    bh = jnp.exp(predictions[..., 4]) * anc[..., 1]
    tx, ty, tw, th = (target[..., 1], target[..., 2], target[..., 3], target[..., 4])

    b1x1, b1x2 = bx - bw / 2, bx + bw / 2
    b1y1, b1y2 = by - bh / 2, by + bh / 2
    b2x1, b2x2 = tx - tw / 2, tx + tw / 2
    b2y1, b2y2 = ty - th / 2, ty + th / 2
    inter = (jnp.maximum(jnp.minimum(b1x2, b2x2) - jnp.maximum(b1x1, b2x1), 0.0) *
             jnp.maximum(jnp.minimum(b1y2, b2y2) - jnp.maximum(b1y1, b2y1), 0.0))
    area1 = jnp.abs((b1x2 - b1x1) * (b1y2 - b1y1))
    area2 = jnp.abs((b2x2 - b2x1) * (b2y2 - b2y1))
    iou = inter / (area1 + area2 - inter + 1e-6)

    objn = jnp.sum(objf)
    obj_sq = (sig(predictions[..., 0]) - iou * target[..., 0]) ** 2
    object_loss = jnp.where(objn > 0, jnp.sum(obj_sq * objf) / objn, 0.0)

    tgt_w = jnp.log(1e-16 + tw / anc[..., 0])
    tgt_h = jnp.log(1e-16 + th / anc[..., 1])
    box_sq = ((bx - tx) ** 2 + (by - ty) ** 2 +
              (predictions[..., 3] - tgt_w) ** 2 + (predictions[..., 4] - tgt_h) ** 2)
    box_loss = jnp.where(objn > 0, jnp.sum(box_sq * objf) / (4.0 * objn), 0.0)

    return no_object_loss + object_loss + box_loss


if __name__ == "__main__":
    key = jax.random.PRNGKey(0)
    B, A, S, C = 2, 3, 16, 7  # 5 box channels + 2 class logits (unused by the loss)
    k1, k2, k3, k4 = jax.random.split(key, 4)

    predictions = jax.random.normal(k1, (B, A, S, S, C), dtype=jnp.float32)
    u = jax.random.uniform(k2, (B, A, S, S))
    t_obj = jnp.where(u < 0.15, 1.0, jnp.where(u < 0.9, 0.0, -1.0))  # obj / noobj / ignore
    t_xy = jax.random.uniform(k3, (B, A, S, S, 2))
    t_wh = jax.random.uniform(k4, (B, A, S, S, 2), minval=0.1, maxval=2.0)
    t_cls = jnp.zeros((B, A, S, S, 1), jnp.float32)
    target = jnp.concatenate([t_obj[..., None], t_xy, t_wh, t_cls], axis=-1)
    anchors = jnp.array([[0.28, 0.22], [0.38, 0.48], [0.90, 0.78]], dtype=jnp.float32)

    loss = jax.block_until_ready(yolo_loss(predictions, target, anchors))
    ref = _reference_loss(predictions, target, anchors)

    assert bool(jnp.isfinite(loss)), ("non-finite loss", loss)
    # Only approximation vs. the f32 reference: tanh-based sigmoid for x/y, the
    # exp-reuse sigmoid for the objectness logit, and the approx EUP reciprocals
    # (<~1e-3 on the scalar loss).
    assert bool(jnp.allclose(loss, ref, rtol=2e-3, atol=2e-3)), (loss, ref)
    print("KERNEL_OK")
</pallas_src>

<mosaic_0001>
module attributes {stable_mosaic.version = 11 : i64} {
  func.func @_yolo_loss_kernel(%arg0: i32, %arg1: i32, %arg2: i32, %arg3: memref<12xf32, #tpu.memory_space<smem>>, %arg4: memref<1x40x128xf32, #tpu.memory_space<vmem>>, %arg5: memref<1x40x128xf32, #tpu.memory_space<vmem>>, %arg6: memref<1x1x8x128xf32, #tpu.memory_space<vmem>>, %arg7: memref<32x128xf32, #tpu.memory_space<vmem>>) attributes {dimension_semantics = [#tpu.dimension_semantics<parallel>, #tpu.dimension_semantics<parallel>, #tpu.dimension_semantics<arbitrary>], iteration_bounds = array<i64: 2, 3, 1>, scalar_prefetch = 1 : i64, scratch_operands = 1 : i64, tpu.core_type = #tpu.core_type<tc>, window_params = [{transform_indices = @transform_0, window_bounds = array<i64: 1, 40, 128>}, {transform_indices = @transform_1, window_bounds = array<i64: 1, 40, 128>}, {transform_indices = @transform_2, window_bounds = array<i64: 1, 1, 8, 128>}]} {
    %c0_i32 = arith.constant 0 : i32
    %0 = arith.cmpi eq, %arg2, %c0_i32 : i32
    %1 = arith.extui %0 : i1 to i32
    %c0_i32_0 = arith.constant 0 : i32
    %2 = arith.cmpi ne, %1, %c0_i32_0 : i32
    scf.if %2 {
      %cst_62 = arith.constant 0.000000e+00 : f32
      %183 = vector.broadcast %cst_62 : f32 to vector<32x128xf32>
      %c0_63 = arith.constant 0 : index
      %c0_64 = arith.constant 0 : index
      %184 = vector.load %arg7[%c0_63, %c0_64] : memref<32x128xf32, #tpu.memory_space<vmem>>, vector<32x128xf32>
      tpu.vector_store %arg7[%c0_63, %c0_64], %183 {strides = array<i32>} : memref<32x128xf32, #tpu.memory_space<vmem>>, vector<32x128xf32>,
    } else {
    }
    %c4_i32 = arith.constant 4 : i32
    %3 = arith.muli %c4_i32, %arg1 : i32
    %4 = arith.index_cast %3 : i32 to index
    %5 = memref.load %arg3[%4] : memref<12xf32, #tpu.memory_space<smem>>
    %c1_i32 = arith.constant 1 : i32
    %6 = arith.addi %3, %c1_i32 : i32
    %7 = arith.index_cast %6 : i32 to index
    %8 = memref.load %arg3[%7] : memref<12xf32, #tpu.memory_space<smem>>
    %c2_i32 = arith.constant 2 : i32
    %9 = arith.addi %3, %c2_i32 : i32
    %10 = arith.index_cast %9 : i32 to index
    %11 = memref.load %arg3[%10] : memref<12xf32, #tpu.memory_space<smem>>
    %c3_i32 = arith.constant 3 : i32
    %12 = arith.addi %3, %c3_i32 : i32
    %13 = arith.index_cast %12 : i32 to index
    %14 = memref.load %arg3[%13] : memref<12xf32, #tpu.memory_space<smem>>
    %15 = vector.broadcast %5 : f32 to vector<8x128xf32>
    %16 = vector.broadcast %8 : f32 to vector<8x128xf32>
    %17 = vector.broadcast %11 : f32 to vector<8x128xf32>
    %18 = vector.broadcast %14 : f32 to vector<8x128xf32>
    %cst = arith.constant 0.000000e+00 : f32
    %19 = vector.broadcast %cst : f32 to vector<8x128xf32>
    %c0_i32_1 = arith.constant 0 : i32
    %c128_i32 = arith.constant 128 : i32
    %20 = arith.muli %c0_i32_1, %c128_i32 : i32
    %21 = tpu.assume_multiple %20, 128 : i32
    %c0 = arith.constant 0 : index
    %c0_2 = arith.constant 0 : index
    %22 = arith.index_cast %21 : i32 to index
    %23 = vector.load %arg4[%c0, %c0_2, %22] : memref<1x40x128xf32, #tpu.memory_space<vmem>>, vector<1x8x128xf32>
    %24 = vector.shape_cast %23 : vector<1x8x128xf32> to vector<8x128xf32>
    %c0_3 = arith.constant 0 : index
    %c8 = arith.constant 8 : index
    %25 = arith.index_cast %21 : i32 to index
    %26 = vector.load %arg4[%c0_3, %c8, %25] : memref<1x40x128xf32, #tpu.memory_space<vmem>>, vector<1x8x128xf32>
    %27 = vector.shape_cast %26 : vector<1x8x128xf32> to vector<8x128xf32>
    %c0_4 = arith.constant 0 : index
    %c16 = arith.constant 16 : index
    %28 = arith.index_cast %21 : i32 to index
    %29 = vector.load %arg4[%c0_4, %c16, %28] : memref<1x40x128xf32, #tpu.memory_space<vmem>>, vector<1x8x128xf32>
    %30 = vector.shape_cast %29 : vector<1x8x128xf32> to vector<8x128xf32>
    %c0_5 = arith.constant 0 : index
    %c24 = arith.constant 24 : index
    %31 = arith.index_cast %21 : i32 to index
    %32 = vector.load %arg4[%c0_5, %c24, %31] : memref<1x40x128xf32, #tpu.memory_space<vmem>>, vector<1x8x128xf32>
    %33 = vector.shape_cast %32 : vector<1x8x128xf32> to vector<8x128xf32>
    %c0_6 = arith.constant 0 : index
    %c32 = arith.constant 32 : index
    %34 = arith.index_cast %21 : i32 to index
    %35 = vector.load %arg4[%c0_6, %c32, %34] : memref<1x40x128xf32, #tpu.memory_space<vmem>>, vector<1x8x128xf32>
    %36 = vector.shape_cast %35 : vector<1x8x128xf32> to vector<8x128xf32>
    %c0_7 = arith.constant 0 : index
    %c0_8 = arith.constant 0 : index
    %37 = arith.index_cast %21 : i32 to index
    %38 = vector.load %arg5[%c0_7, %c0_8, %37] : memref<1x40x128xf32, #tpu.memory_space<vmem>>, vector<1x8x128xf32>
    %39 = vector.shape_cast %38 : vector<1x8x128xf32> to vector<8x128xf32>
    %c0_9 = arith.constant 0 : index
    %c8_10 = arith.constant 8 : index
    %40 = arith.index_cast %21 : i32 to index
    %41 = vector.load %arg5[%c0_9, %c8_10, %40] : memref<1x40x128xf32, #tpu.memory_space<vmem>>, vector<1x8x128xf32>
    %42 = vector.shape_cast %41 : vector<1x8x128xf32> to vector<8x128xf32>
    %c0_11 = arith.constant 0 : index
    %c16_12 = arith.constant 16 : index
    %43 = arith.index_cast %21 : i32 to index
    %44 = vector.load %arg5[%c0_11, %c16_12, %43] : memref<1x40x128xf32, #tpu.memory_space<vmem>>, vector<1x8x128xf32>
    %45 = vector.shape_cast %44 : vector<1x8x128xf32> to vector<8x128xf32>
    %c0_13 = arith.constant 0 : index
    %c24_14 = arith.constant 24 : index
    %46 = arith.index_cast %21 : i32 to index
    %47 = vector.load %arg5[%c0_13, %c24_14, %46] : memref<1x40x128xf32, #tpu.memory_space<vmem>>, vector<1x8x128xf32>
    %48 = vector.shape_cast %47 : vector<1x8x128xf32> to vector<8x128xf32>
    %c0_15 = arith.constant 0 : index
    %c32_16 = arith.constant 32 : index
    %49 = arith.index_cast %21 : i32 to index
    %50 = vector.load %arg5[%c0_15, %c32_16, %49] : memref<1x40x128xf32, #tpu.memory_space<vmem>>, vector<1x8x128xf32>
    %51 = vector.shape_cast %50 : vector<1x8x128xf32> to vector<8x128xf32>
    %cst_17 = arith.constant 1.000000e+00 : f32
    %52 = vector.broadcast %cst_17 : f32 to vector<8x128xf32>
    %53 = arith.cmpf oeq, %39, %52 : vector<8x128xf32>
    %54 = arith.extui %53 : vector<8x128xi1> to vector<8x128xi32>
    %55 = arith.sitofp %54 : vector<8x128xi32> to vector<8x128xf32>
    %cst_18 = arith.constant 0.000000e+00 : f32
    %56 = vector.broadcast %cst_18 : f32 to vector<8x128xf32>
    %57 = arith.cmpf oeq, %39, %56 : vector<8x128xf32>
    %58 = arith.extui %57 : vector<8x128xi1> to vector<8x128xi32>
    %59 = arith.sitofp %58 : vector<8x128xi32> to vector<8x128xf32>
    %60 = math.absf %24 : vector<8x128xf32>
    %cst_19 = arith.constant 0.000000e+00 : f32
    %61 = vector.broadcast %cst_19 : f32 to vector<8x128xf32>
    %62 = arith.subf %61, %60 : vector<8x128xf32>
    %63 = math.exp %62 : vector<8x128xf32>
    %cst_20 = arith.constant 1.000000e+00 : f32
    %64 = vector.broadcast %cst_20 : f32 to vector<8x128xf32>
    %65 = arith.addf %64, %63 : vector<8x128xf32>
    %cst_21 = arith.constant 0.000000e+00 : f32
    %66 = vector.broadcast %cst_21 : f32 to vector<8x128xf32>
    %67 = arith.maximumf %24, %66 : vector<8x128xf32>
    %68 = math.log %65 : vector<8x128xf32>
    %69 = arith.addf %67, %68 : vector<8x128xf32>
    %70 = tpu.reciprocal %65 {approx = true} : vector<8x128xf32> -> vector<8x128xf32>
    %cst_22 = arith.constant 0.000000e+00 : f32
    %71 = vector.broadcast %cst_22 : f32 to vector<8x128xf32>
    %72 = arith.cmpf oge, %24, %71 : vector<8x128xf32>
    %73 = arith.mulf %63, %70 : vector<8x128xf32>
    %74 = arith.select %72, %70, %73 : vector<8x128xi1>, vector<8x128xf32>
    %cst_23 = arith.constant 5.000000e-01 : f32
    %75 = vector.broadcast %cst_23 : f32 to vector<8x128xf32>
    %76 = arith.mulf %75, %27 : vector<8x128xf32>
    %77 = math.tanh %76 : vector<8x128xf32>
    %cst_24 = arith.constant 1.000000e+00 : f32
    %78 = vector.broadcast %cst_24 : f32 to vector<8x128xf32>
    %79 = arith.addf %78, %77 : vector<8x128xf32>
    %cst_25 = arith.constant 5.000000e-01 : f32
    %80 = vector.broadcast %cst_25 : f32 to vector<8x128xf32>
    %81 = arith.mulf %80, %79 : vector<8x128xf32>
    %cst_26 = arith.constant 5.000000e-01 : f32
    %82 = vector.broadcast %cst_26 : f32 to vector<8x128xf32>
    %83 = arith.mulf %82, %30 : vector<8x128xf32>
    %84 = math.tanh %83 : vector<8x128xf32>
    %cst_27 = arith.constant 1.000000e+00 : f32
    %85 = vector.broadcast %cst_27 : f32 to vector<8x128xf32>
    %86 = arith.addf %85, %84 : vector<8x128xf32>
    %cst_28 = arith.constant 5.000000e-01 : f32
    %87 = vector.broadcast %cst_28 : f32 to vector<8x128xf32>
    %88 = arith.mulf %87, %86 : vector<8x128xf32>
    %89 = math.exp %33 : vector<8x128xf32>
    %90 = arith.mulf %89, %15 : vector<8x128xf32>
    %91 = math.exp %36 : vector<8x128xf32>
    %92 = arith.mulf %91, %16 : vector<8x128xf32>
    %cst_29 = arith.constant 5.000000e-01 : f32
    %93 = vector.broadcast %cst_29 : f32 to vector<8x128xf32>
    %94 = arith.mulf %93, %90 : vector<8x128xf32>
    %95 = arith.subf %81, %94 : vector<8x128xf32>
    %cst_30 = arith.constant 5.000000e-01 : f32
    %96 = vector.broadcast %cst_30 : f32 to vector<8x128xf32>
    %97 = arith.mulf %96, %90 : vector<8x128xf32>
    %98 = arith.addf %81, %97 : vector<8x128xf32>
    %cst_31 = arith.constant 5.000000e-01 : f32
    %99 = vector.broadcast %cst_31 : f32 to vector<8x128xf32>
    %100 = arith.mulf %99, %92 : vector<8x128xf32>
    %101 = arith.subf %88, %100 : vector<8x128xf32>
    %cst_32 = arith.constant 5.000000e-01 : f32
    %102 = vector.broadcast %cst_32 : f32 to vector<8x128xf32>
    %103 = arith.mulf %102, %92 : vector<8x128xf32>
    %104 = arith.addf %88, %103 : vector<8x128xf32>
    %cst_33 = arith.constant 5.000000e-01 : f32
    %105 = vector.broadcast %cst_33 : f32 to vector<8x128xf32>
    %106 = arith.mulf %105, %48 : vector<8x128xf32>
    %107 = arith.subf %42, %106 : vector<8x128xf32>
    %cst_34 = arith.constant 5.000000e-01 : f32
    %108 = vector.broadcast %cst_34 : f32 to vector<8x128xf32>
    %109 = arith.mulf %108, %48 : vector<8x128xf32>
    %110 = arith.addf %42, %109 : vector<8x128xf32>
    %cst_35 = arith.constant 5.000000e-01 : f32
    %111 = vector.broadcast %cst_35 : f32 to vector<8x128xf32>
    %112 = arith.mulf %111, %51 : vector<8x128xf32>
    %113 = arith.subf %45, %112 : vector<8x128xf32>
    %cst_36 = arith.constant 5.000000e-01 : f32
    %114 = vector.broadcast %cst_36 : f32 to vector<8x128xf32>
    %115 = arith.mulf %114, %51 : vector<8x128xf32>
    %116 = arith.addf %45, %115 : vector<8x128xf32>
    %117 = arith.minimumf %98, %110 : vector<8x128xf32>
    %118 = arith.maximumf %95, %107 : vector<8x128xf32>
    %119 = arith.subf %117, %118 : vector<8x128xf32>
    %cst_37 = arith.constant 0.000000e+00 : f32
    %120 = vector.broadcast %cst_37 : f32 to vector<8x128xf32>
    %121 = arith.maximumf %119, %120 : vector<8x128xf32>
    %122 = arith.minimumf %104, %116 : vector<8x128xf32>
    %123 = arith.maximumf %101, %113 : vector<8x128xf32>
    %124 = arith.subf %122, %123 : vector<8x128xf32>
    %cst_38 = arith.constant 0.000000e+00 : f32
    %125 = vector.broadcast %cst_38 : f32 to vector<8x128xf32>
    %126 = arith.maximumf %124, %125 : vector<8x128xf32>
    %127 = arith.mulf %121, %126 : vector<8x128xf32>
    %128 = arith.mulf %90, %92 : vector<8x128xf32>
    %129 = math.absf %128 : vector<8x128xf32>
    %130 = arith.mulf %48, %51 : vector<8x128xf32>
    %131 = math.absf %130 : vector<8x128xf32>
    %132 = arith.addf %129, %131 : vector<8x128xf32>
    %133 = arith.subf %132, %127 : vector<8x128xf32>
    %cst_39 = arith.constant 9.99999997E-7 : f32
    %134 = vector.broadcast %cst_39 : f32 to vector<8x128xf32>
    %135 = arith.addf %133, %134 : vector<8x128xf32>
    %136 = tpu.reciprocal %135 {approx = true} : vector<8x128xf32> -> vector<8x128xf32>
    %137 = arith.mulf %127, %136 : vector<8x128xf32>
    %138 = arith.subf %74, %137 : vector<8x128xf32>
    %139 = arith.mulf %138, %138 : vector<8x128xf32>
    %140 = arith.mulf %48, %17 : vector<8x128xf32>
    %cst_40 = arith.constant 1.000000e-16 : f32
    %141 = vector.broadcast %cst_40 : f32 to vector<8x128xf32>
    %142 = arith.addf %141, %140 : vector<8x128xf32>
    %143 = math.log %142 : vector<8x128xf32>
    %144 = arith.mulf %51, %18 : vector<8x128xf32>
    %cst_41 = arith.constant 1.000000e-16 : f32
    %145 = vector.broadcast %cst_41 : f32 to vector<8x128xf32>
    %146 = arith.addf %145, %144 : vector<8x128xf32>
    %147 = math.log %146 : vector<8x128xf32>
    %148 = arith.subf %81, %42 : vector<8x128xf32>
    %149 = arith.mulf %148, %148 : vector<8x128xf32>
    %150 = arith.subf %88, %45 : vector<8x128xf32>
    %151 = arith.mulf %150, %150 : vector<8x128xf32>
    %152 = arith.addf %149, %151 : vector<8x128xf32>
    %153 = arith.subf %33, %143 : vector<8x128xf32>
    %154 = arith.mulf %153, %153 : vector<8x128xf32>
    %155 = arith.addf %152, %154 : vector<8x128xf32>
    %156 = arith.subf %36, %147 : vector<8x128xf32>
    %157 = arith.mulf %156, %156 : vector<8x128xf32>
    %158 = arith.addf %155, %157 : vector<8x128xf32>
    %159 = arith.mulf %69, %59 : vector<8x128xf32>
    %160 = arith.addf %19, %159 : vector<8x128xf32>
    %161 = arith.addf %19, %59 : vector<8x128xf32>
    %162 = arith.addf %19, %55 : vector<8x128xf32>
    %cst_42 = arith.constant 2.500000e-01 : f32
    %163 = vector.broadcast %cst_42 : f32 to vector<8x128xf32>
    %164 = arith.mulf %163, %158 : vector<8x128xf32>
    %165 = arith.addf %139, %164 : vector<8x128xf32>
    %166 = arith.mulf %165, %55 : vector<8x128xf32>
    %167 = arith.addf %19, %166 : vector<8x128xf32>
    %c1_i32_43 = arith.constant 1 : i32
    %c0_44 = arith.constant 0 : index
    %c0_45 = arith.constant 0 : index
    %168 = vector.load %arg7[%c0_44, %c0_45] : memref<32x128xf32, #tpu.memory_space<vmem>>, vector<8x128xf32>
    %169 = arith.addf %168, %160 : vector<8x128xf32>
    %c0_46 = arith.constant 0 : index
    %c0_47 = arith.constant 0 : index
    %170 = vector.load %arg7[%c0_46, %c0_47] : memref<32x128xf32, #tpu.memory_space<vmem>>, vector<8x128xf32>
    tpu.vector_store %arg7[%c0_46, %c0_47], %169 {strides = array<i32>} : memref<32x128xf32, #tpu.memory_space<vmem>>, vector<8x128xf32>,
    %c8_48 = arith.constant 8 : index
    %c0_49 = arith.constant 0 : index
    %171 = vector.load %arg7[%c8_48, %c0_49] : memref<32x128xf32, #tpu.memory_space<vmem>>, vector<8x128xf32>
    %172 = arith.addf %171, %161 : vector<8x128xf32>
    %c8_50 = arith.constant 8 : index
    %c0_51 = arith.constant 0 : index
    %173 = vector.load %arg7[%c8_50, %c0_51] : memref<32x128xf32, #tpu.memory_space<vmem>>, vector<8x128xf32>
    tpu.vector_store %arg7[%c8_50, %c0_51], %172 {strides = array<i32>} : memref<32x128xf32, #tpu.memory_space<vmem>>, vector<8x128xf32>,
    %c16_52 = arith.constant 16 : index
    %c0_53 = arith.constant 0 : index
    %174 = vector.load %arg7[%c16_52, %c0_53] : memref<32x128xf32, #tpu.memory_space<vmem>>, vector<8x128xf32>
    %175 = arith.addf %174, %162 : vector<8x128xf32>
    %c16_54 = arith.constant 16 : index
    %c0_55 = arith.constant 0 : index
    %176 = vector.load %arg7[%c16_54, %c0_55] : memref<32x128xf32, #tpu.memory_space<vmem>>, vector<8x128xf32>
    tpu.vector_store %arg7[%c16_54, %c0_55], %175 {strides = array<i32>} : memref<32x128xf32, #tpu.memory_space<vmem>>, vector<8x128xf32>,
    %c24_56 = arith.constant 24 : index
    %c0_57 = arith.constant 0 : index
    %177 = vector.load %arg7[%c24_56, %c0_57] : memref<32x128xf32, #tpu.memory_space<vmem>>, vector<8x128xf32>
    %178 = arith.addf %177, %167 : vector<8x128xf32>
    %c24_58 = arith.constant 24 : index
    %c0_59 = arith.constant 0 : index
    %179 = vector.load %arg7[%c24_58, %c0_59] : memref<32x128xf32, #tpu.memory_space<vmem>>, vector<8x128xf32>
    tpu.vector_store %arg7[%c24_58, %c0_59], %178 {strides = array<i32>} : memref<32x128xf32, #tpu.memory_space<vmem>>, vector<8x128xf32>,
    %c0_i32_60 = arith.constant 0 : i32
    %180 = arith.cmpi eq, %arg2, %c0_i32_60 : i32
    %181 = arith.extui %180 : i1 to i32
    %c0_i32_61 = arith.constant 0 : i32
    %182 = arith.cmpi ne, %181, %c0_i32_61 : i32
    scf.if %182 {
      %c0_62 = arith.constant 0 : index
      %c0_63 = arith.constant 0 : index
      %183 = vector.load %arg7[%c0_62, %c0_63] : memref<32x128xf32, #tpu.memory_space<vmem>>, vector<8x128xf32>
      %184 = vector.shape_cast %183 : vector<8x128xf32> to vector<1x8x128xf32>
      %cst_64 = arith.constant dense<0.000000e+00> : vector<1xf32>
      %185 = vector.multi_reduction <add>, %184, %cst_64 [1, 2] : vector<1x8x128xf32> to vector<1xf32>
      %186 = vector.shape_cast %185 : vector<1xf32> to vector<1x1x1xf32>
      %187 = vector.extract %186[0, 0, 0] : f32 from vector<1x1x1xf32>
      %c8_65 = arith.constant 8 : index
      %c0_66 = arith.constant 0 : index
      %188 = vector.load %arg7[%c8_65, %c0_66] : memref<32x128xf32, #tpu.memory_space<vmem>>, vector<8x128xf32>
      %189 = vector.shape_cast %188 : vector<8x128xf32> to vector<1x8x128xf32>
      %cst_67 = arith.constant dense<0.000000e+00> : vector<1xf32>
      %190 = vector.multi_reduction <add>, %189, %cst_67 [1, 2] : vector<1x8x128xf32> to vector<1xf32>
      %191 = vector.shape_cast %190 : vector<1xf32> to vector<1x1x1xf32>
      %192 = vector.extract %191[0, 0, 0] : f32 from vector<1x1x1xf32>
      %c16_68 = arith.constant 16 : index
      %c0_69 = arith.constant 0 : index
      %193 = vector.load %arg7[%c16_68, %c0_69] : memref<32x128xf32, #tpu.memory_space<vmem>>, vector<8x128xf32>
      %194 = vector.shape_cast %193 : vector<8x128xf32> to vector<1x8x128xf32>
      %cst_70 = arith.constant dense<0.000000e+00> : vector<1xf32>
      %195 = vector.multi_reduction <add>, %194, %cst_70 [1, 2] : vector<1x8x128xf32> to vector<1xf32>
      %196 = vector.shape_cast %195 : vector<1xf32> to vector<1x1x1xf32>
      %197 = vector.extract %196[0, 0, 0] : f32 from vector<1x1x1xf32>
      %c24_71 = arith.constant 24 : index
      %c0_72 = arith.constant 0 : index
      %198 = vector.load %arg7[%c24_71, %c0_72] : memref<32x128xf32, #tpu.memory_space<vmem>>, vector<8x128xf32>
      %199 = vector.shape_cast %198 : vector<8x128xf32> to vector<1x8x128xf32>
      %cst_73 = arith.constant dense<0.000000e+00> : vector<1xf32>
      %200 = vector.multi_reduction <add>, %199, %cst_73 [1, 2] : vector<1x8x128xf32> to vector<1xf32>
      %201 = vector.shape_cast %200 : vector<1xf32> to vector<1x1x1xf32>
      %202 = vector.extract %201[0, 0, 0] : f32 from vector<1x1x1xf32>
      %203 = tpu.iota {dimensions = array<i32: 0>} : vector<8x128xi32>
      %c0_i32_74 = arith.constant 0 : i32
      %204 = vector.broadcast %c0_i32_74 : i32 to vector<8x128xi32>
      %205 = arith.cmpi eq, %203, %204 : vector<8x128xi32>
      %c1_i32_75 = arith.constant 1 : i32
      %206 = vector.broadcast %c1_i32_75 : i32 to vector<8x128xi32>
      %207 = arith.cmpi eq, %203, %206 : vector<8x128xi32>
      %c2_i32_76 = arith.constant 2 : i32
      %208 = vector.broadcast %c2_i32_76 : i32 to vector<8x128xi32>
      %209 = arith.cmpi eq, %203, %208 : vector<8x128xi32>
      %c3_i32_77 = arith.constant 3 : i32
      %210 = vector.broadcast %c3_i32_77 : i32 to vector<8x128xi32>
      %211 = arith.cmpi eq, %203, %210 : vector<8x128xi32>
      %cst_78 = arith.constant 0.000000e+00 : f32
      %212 = vector.broadcast %202 : f32 to vector<8x128xf32>
      %213 = vector.broadcast %cst_78 : f32 to vector<8x128xf32>
      %214 = arith.select %211, %212, %213 : vector<8x128xi1>, vector<8x128xf32>
      %215 = vector.broadcast %197 : f32 to vector<8x128xf32>
      %216 = arith.select %209, %215, %214 : vector<8x128xi1>, vector<8x128xf32>
      %217 = vector.broadcast %192 : f32 to vector<8x128xf32>
      %218 = arith.select %207, %217, %216 : vector<8x128xi1>, vector<8x128xf32>
      %219 = vector.broadcast %187 : f32 to vector<8x128xf32>
      %220 = arith.select %205, %219, %218 : vector<8x128xi1>, vector<8x128xf32>
      %c0_79 = arith.constant 0 : index
      %c0_80 = arith.constant 0 : index
      %c0_81 = arith.constant 0 : index
      %c0_82 = arith.constant 0 : index
      %221 = vector.load %arg6[%c0_79, %c0_80, %c0_81, %c0_82] : memref<1x1x8x128xf32, #tpu.memory_space<vmem>>, vector<1x1x8x128xf32>
      %222 = vector.shape_cast %221 : vector<1x1x8x128xf32> to vector<8x128xf32>
      %223 = vector.shape_cast %220 : vector<8x128xf32> to vector<1x1x8x128xf32>
      tpu.vector_store %arg6[%c0_79, %c0_80, %c0_81, %c0_82], %223 {strides = array<i32>} : memref<1x1x8x128xf32, #tpu.memory_space<vmem>>, vector<1x1x8x128xf32>,
    } else {
    }
    return
  }
  func.func @transform_0(%arg0: i32, %arg1: i32, %arg2: i32, %arg3: memref<12xf32, #tpu.memory_space<smem>>) -> (i32, i32, i32) {
    %c1_i32 = arith.constant 1 : i32
    %0 = arith.muli %arg0, %c1_i32 : i32
    %1 = arith.addi %0, %arg2 : i32
    %c0_i32 = arith.constant 0 : i32
    %c0_i32_0 = arith.constant 0 : i32
    return %arg1, %c0_i32, %1 : i32, i32, i32
  }
  func.func @transform_1(%arg0: i32, %arg1: i32, %arg2: i32, %arg3: memref<12xf32, #tpu.memory_space<smem>>) -> (i32, i32, i32) {
    %c1_i32 = arith.constant 1 : i32
    %0 = arith.muli %arg0, %c1_i32 : i32
    %1 = arith.addi %0, %arg2 : i32
    %c0_i32 = arith.constant 0 : i32
    %c0_i32_0 = arith.constant 0 : i32
    return %arg1, %c0_i32, %1 : i32, i32, i32
  }
  func.func @transform_2(%arg0: i32, %arg1: i32, %arg2: i32, %arg3: memref<12xf32, #tpu.memory_space<smem>>) -> (i32, i32, i32, i32) {
    %c0_i32 = arith.constant 0 : i32
    %c0_i32_0 = arith.constant 0 : i32
    %c0_i32_1 = arith.constant 0 : i32
    return %arg0, %arg1, %c0_i32, %c0_i32_0 : i32, i32, i32, i32
  }
}

</mosaic_0001>

<llo_original>
// kernel: yolo_loss.1
$region0: #{yolo_loss.1}
  #allocation0 [shape = 'u32[]', space=smem, size = 0x4, offset = 0x4, fixed_abs, tag = 'smem constant byte address 0x4 - core index']
  #allocation1 [shape = 'u32[144,128]{1,0:T(1,128)}', space=vmem, size = 0x12000, scoped, tag = 'internal scratch']
  #allocation2 [shape = 'f32[32,128]{1,0:T(8,128)}', space=vmem, size = 0x4000, scoped, tag = 'scratch operand']
  #allocation3 [shape = 's32[1]{0}', space=sflag, size = 0x4, scoped, tag = 'scoped memory for yolo_loss.1']
  #allocation4 [shape = 'u8[512]{0}', space=smem, size = 0x200, scoped, tag = 'prefetched SMEM operand 0']
  %s0 = inlined_call_operand.vmem [shape: f32[12], index: 0, kind: input, shape index: {}]
  %s1 = inlined_call_operand.vmem [shape: f32[3,40,256], index: 1, kind: input, shape index: {}]
  %s2 = inlined_call_operand.vmem [shape: f32[3,40,256], index: 2, kind: input, shape index: {}]
  %s3 = inlined_call_operand.vmem [shape: f32[2,3,8,128], index: 3, kind: output, shape index: {}]
  %s4 = sld [smem:[#allocation0]]
  $region125: #{yolo_loss.1} parent=0
    _
  %s6 = ssub.s32 1, %s4
  %s7 = scalar_select 0, %s6, %s4
  %s8 = sshll.u32 %s0, 4
  %s9 = int_to_ptr.vmem [resolvable:$true] %s8
  %11 = dma.vmem_to_smem %s9, 16, [#allocation4], [#allocation3]
  %12 = dma.done [#allocation3], 16
  %13 = sfence
  $region1: #{yolo_loss.1} parent=0
    #allocation5 [shape = 'u8[40960]{0}', space=vmem, size = 0xa000, scoped, tag = 'input window, operand 1']
    #allocation6 [shape = 'u8[40960]{0}', space=vmem, size = 0xa000, scoped, tag = 'input window, operand 2']
    loop: start=0, step=1, limit=8
    $region2: #{yolo_loss.1} parent=1 // loop_pre_header
      _
    $region3: #{yolo_loss.1} parent=1 // loop_header
      %s15 = sphi 0, %s19
      %p16 = scmp.ge.s32.totalorder %s15, 8
      %s22 = sphi 0, %s41
      %s23 = sphi 0, %s37
      %s24 = sphi 0, %s33
      %s25 = sphi 0, %s22
      %s26 = sphi 0, %s23
      %s27 = sphi 0, %s24
      %s28 = sphi 0, %s25
      %s29 = sphi 0, %s26
      %s30 = sphi 0, %s27
      %s48 = sphi 0, %s50
      %s51 = sphi 0, %s48
      %s52 = sphi 0, %s51
      %s68 = sphi 0, %s52
      %s78 = sphi 0, %s80
      %s81 = sphi 0, %s78
      %s82 = sphi 0, %s81
      %s98 = sphi 0, %s82
      %s106 = sphi 0, %s108
      %s109 = sphi 0, %s106
      %s110 = sphi 0, %s109
      %s126 = sphi 0, %s110
    $region4: #{yolo_loss.1} parent=1 // loop_header_branch
      %18 = sbr.rel (%p16) target = $region8
    $region5: #{yolo_loss.1} parent=1 // loop_body
      %s20 = ssub.s32 %s15, 1
      %s21 = ssub.s32 %s15, 2
      %s31 = sadd.s32 1, %s24
      %p32 = scmp.ge.s32.totalorder %s31, 1
      %s33 = scalar_select %p32, 0, %s31
      %s34 = sadd.s32 1, %s23
      %s35 = scalar_select %p32, %s34, %s23
      %p36 = scmp.ge.s32.totalorder %s35, 3
      %s37 = scalar_select %p36, 0, %s35
      %s38 = sadd.s32 1, %s22
      %s39 = scalar_select %p36, %s38, %s22
      %p40 = scmp.ge.s32.totalorder %s39, 2
      %s41 = scalar_select %p40, 0, %s39
      %s42 = sadd.s32 %s22, %s24
      %s43 = sadd.s32 %s41, %s33
      %s44 = ssub.s32 %s23, %s37
      %s45 = ssub.s32 %s42, %s43
      %s46 = sor.u32 %s44, %s45
      %p47 = scmp.eq.s32.totalorder %s46, 0
      %s49 = sadd.s32 %s48, 1
      %s50 = scalar_select %p47, %s48, %s49
      %p53 = pneg %p47
      %p54 = scmp.eq.s32.totalorder %s15, 5
      %p55 = por %p53, %p54
      %p56 = scmp.ne.s32.totalorder %s48, %s51
      %p57 = scmp.eq.s32.totalorder %s15, 0
      %p58 = por %p56, %p57
      %p59 = scmp.ne.s32.totalorder %s48, %s51
      %p60 = scmp.eq.s32.totalorder %s20, 5
      %p61 = por %p59, %p60
      %p62 = scmp.ne.s32.totalorder %s51, %s52
      %p63 = scmp.eq.s32.totalorder %s20, 0
      %p64 = por %p62, %p63
      %p65 = scmp.ne.s32.totalorder %s51, %s52
      %p66 = scmp.eq.s32.totalorder %s21, 5
      %p67 = por %p65, %p66
      %p69 = scmp.ne.s32.totalorder %s52, %s68
      %p70 = scmp.eq.s32.totalorder %s21, 0
      %p71 = por %p69, %p70
      %s72 = sadd.s32 %s22, %s24
      %s73 = sadd.s32 %s41, %s33
      %s74 = ssub.s32 %s23, %s37
      %s75 = ssub.s32 %s72, %s73
      %s76 = sor.u32 %s74, %s75
      %p77 = scmp.eq.s32.totalorder %s76, 0
      %s79 = sadd.s32 %s78, 1
      %s80 = scalar_select %p77, %s78, %s79
      %p83 = pneg %p77
      %p84 = scmp.eq.s32.totalorder %s15, 5
      %p85 = por %p83, %p84
      %p86 = scmp.ne.s32.totalorder %s78, %s81
      %p87 = scmp.eq.s32.totalorder %s15, 0
      %p88 = por %p86, %p87
      %p89 = scmp.ne.s32.totalorder %s78, %s81
      %p90 = scmp.eq.s32.totalorder %s20, 5
      %p91 = por %p89, %p90
      %p92 = scmp.ne.s32.totalorder %s81, %s82
      %p93 = scmp.eq.s32.totalorder %s20, 0
      %p94 = por %p92, %p93
      %p95 = scmp.ne.s32.totalorder %s81, %s82
      %p96 = scmp.eq.s32.totalorder %s21, 5
      %p97 = por %p95, %p96
      %p99 = scmp.ne.s32.totalorder %s82, %s98
      %p100 = scmp.eq.s32.totalorder %s21, 0
      %p101 = por %p99, %p100
      %s102 = ssub.s32 %s22, %s41
      %s103 = ssub.s32 %s23, %s37
      %s104 = sor.u32 %s102, %s103
      %p105 = scmp.eq.s32.totalorder %s104, 0
      %s107 = sadd.s32 %s106, 1
      %s108 = scalar_select %p105, %s106, %s107
      %p111 = pneg %p105
      %p112 = scmp.eq.s32.totalorder %s15, 5
      %p113 = por %p111, %p112
      %p114 = scmp.ne.s32.totalorder %s106, %s109
      %p115 = scmp.eq.s32.totalorder %s15, 0
      %p116 = por %p114, %p115
      %p117 = scmp.ne.s32.totalorder %s106, %s109
      %p118 = scmp.eq.s32.totalorder %s20, 5
      %p119 = por %p117, %p118
      %p120 = scmp.ne.s32.totalorder %s109, %s110
      %p121 = scmp.eq.s32.totalorder %s20, 0
      %p122 = por %p120, %p121
      %p123 = scmp.ne.s32.totalorder %s109, %s110
      %p124 = scmp.eq.s32.totalorder %s21, 5
      %p125 = por %p123, %p124
      %p127 = scmp.ne.s32.totalorder %s110, %s126
      %p128 = scmp.eq.s32.totalorder %s21, 0
      %p129 = por %p127, %p128
      %p130 = scmp.le.s32.totalorder 1, %s15
      %p131 = scmp.lt.s32.totalorder %s15, 7
      %p132 = pnand %p130, %p131
      %p133 = pneg %p132
      // Predicated region
      $region9: #{yolo_loss.1} parent=5 // pred_check
        _
      $region10: #{yolo_loss.1} parent=5 // pred_check_branch
        %135 = sbr.rel (%p132) target = $region12
      $region11: #{yolo_loss.1} parent=5 // pred_region
        %s136 = ssub.s32 %s15, 1
      $region12: #{yolo_loss.1} parent=5 // pred_fallthru
        _
      %p137 = scmp.lt.s32.totalorder %s15, 6
      // Predicated region
      $region13: #{yolo_loss.1} parent=5 // pred_check
        %p138 = pneg %p137
      $region14: #{yolo_loss.1} parent=5 // pred_check_branch
        %140 = sbr.rel (%p138) target = $region16
      $region15: #{yolo_loss.1} parent=5 // pred_region
        // Predicated region
        $region17: #{yolo_loss.1} parent=15 // pred_check
          %p141 = pneg %p58
        $region18: #{yolo_loss.1} parent=15 // pred_check_branch
          %143 = sbr.rel (%p141) target = $region20
        $region19: #{yolo_loss.1} parent=15 // pred_region
          %s144 = sand.u32 %s48, 1
          %s145 = sand.u32 %s48, 1
          %s146 = smul.addr %s145, 40
          %s147 = scalar_lea.vmem [#allocation5], %s146
          %s148 = sadd.s32 %s22, %s24
          %s149 = smul.addr %s23, 10
          %s150 = sadd.s32 %s148, %s149
          %s151 = smul.addr %s150, 8
          %s152 = scalar_lea.vmem %s1, %s151
          // Predicated region
          $region21: #{yolo_loss.1} parent=19 // pred_check
            _
          $region22: #{yolo_loss.1} parent=19 // pred_check_branch
            %154 = sbr.rel (0) target = $region24
          $region23: #{yolo_loss.1} parent=19 // pred_region
            // Predicated region
            $region25: #{yolo_loss.1} parent=23 // pred_check
              _
            $region26: #{yolo_loss.1} parent=23 // pred_check_branch
              %156 = sbr.rel (0) target = $region28
            $region27: #{yolo_loss.1} parent=23 // pred_region
              // Predicated region
              $region40: #{yolo_loss.1} parent=27 // pred_check
                _
              $region41: #{yolo_loss.1} parent=27 // pred_check_branch
                %179 = sbr.rel (0) target = $region43
              $region42: #{yolo_loss.1} parent=27 // pred_region
                loop: start=0, step=1, limit=1
                $region44: #{yolo_loss.1} parent=42 // loop_pre_header
                  _
                $region45: #{yolo_loss.1} parent=42 // loop_header
                  %s181 = sphi 0, %s185
                  %p182 = scmp.ge.s32.totalorder %s181, 1
                  %s186 = sphi %s152, %s152
                  %s187 = sphi %s147, %s147
                $region46: #{yolo_loss.1} parent=42 // loop_header_branch
                  %184 = sbr.rel (%p182) target = $region50
                $region47: #{yolo_loss.1} parent=42 // loop_body
                  %v188 = vld [vmem:[%s186] sm:$0xff]
                  %189 = vst [vmem:[%s187] sm:$0xff] %v188
                  %v190 = vld [vmem:[%s186 + $0x10] sm:$0xff]
                  %191 = vst [vmem:[%s187 + $0x8] sm:$0xff] %v190
                  %v192 = vld [vmem:[%s186 + $0x20] sm:$0xff]
                  %193 = vst [vmem:[%s187 + $0x10] sm:$0xff] %v192
                  %v194 = vld [vmem:[%s186 + $0x30] sm:$0xff]
                  %195 = vst [vmem:[%s187 + $0x18] sm:$0xff] %v194
                  %v196 = vld [vmem:[%s186 + $0x40] sm:$0xff]
                  %197 = vst [vmem:[%s187 + $0x20] sm:$0xff] %v196
                $region48: #{yolo_loss.1} parent=42 // loop_footer
                  %s185 = sadd.s32 1, %s181
                $region49: #{yolo_loss.1} parent=42 // loop_footer_branch
                  %180 = sbr.rel target = $region45
                $region50: #{yolo_loss.1} parent=42 // loop_exit
                  _
              $region43: #{yolo_loss.1} parent=27 // pred_fallthru
                _
              // Predicated region
              $region51: #{yolo_loss.1} parent=27 // pred_check
                _
              $region52: #{yolo_loss.1} parent=27 // pred_check_branch
                %199 = sbr.rel target = $region54
              $region53: #{yolo_loss.1} parent=27 // pred_region
                _
              $region54: #{yolo_loss.1} parent=27 // pred_fallthru
                _
            $region28: #{yolo_loss.1} parent=23 // pred_fallthru
              _
            // Predicated region
            $region29: #{yolo_loss.1} parent=23 // pred_check
              _
            $region30: #{yolo_loss.1} parent=23 // pred_check_branch
              %158 = sbr.rel target = $region32
            $region31: #{yolo_loss.1} parent=23 // pred_region
              loop: start=0, step=1, limit=1
              $region33: #{yolo_loss.1} parent=31 // loop_pre_header
                _
              $region34: #{yolo_loss.1} parent=31 // loop_header
                %s161 = sphi 0, %s165
                %p162 = scmp.ge.s32.totalorder %s161, 1
                %s166 = sphi %s152, %s152
                %s167 = sphi %s147, %s147
              $region35: #{yolo_loss.1} parent=31 // loop_header_branch
                %164 = sbr.rel (%p162) target = $region39
              $region36: #{yolo_loss.1} parent=31 // loop_body
                %v168 = vld [vmem:[%s166] sm:$0xff]
                %169 = vst [vmem:[%s167] sm:$0xff] %v168
                %v170 = vld [vmem:[%s166 + $0x10] sm:$0xff]
                %171 = vst [vmem:[%s167 + $0x8] sm:$0xff] %v170
                %v172 = vld [vmem:[%s166 + $0x20] sm:$0xff]
                %173 = vst [vmem:[%s167 + $0x10] sm:$0xff] %v172
                %v174 = vld [vmem:[%s166 + $0x30] sm:$0xff]
                %175 = vst [vmem:[%s167 + $0x18] sm:$0xff] %v174
                %v176 = vld [vmem:[%s166 + $0x40] sm:$0xff]
                %177 = vst [vmem:[%s167 + $0x20] sm:$0xff] %v176
              $region37: #{yolo_loss.1} parent=31 // loop_footer
                %s165 = sadd.s32 1, %s161
              $region38: #{yolo_loss.1} parent=31 // loop_footer_branch
                %160 = sbr.rel target = $region34
              $region39: #{yolo_loss.1} parent=31 // loop_exit
                _
            $region32: #{yolo_loss.1} parent=23 // pred_fallthru
              _
          $region24: #{yolo_loss.1} parent=19 // pred_fallthru
            _
          %200 = vnop
        $region20: #{yolo_loss.1} parent=15 // pred_fallthru
          _
        // Predicated region
        $region55: #{yolo_loss.1} parent=15 // pred_check
          %p201 = pneg %p88
        $region56: #{yolo_loss.1} parent=15 // pred_check_branch
          %203 = sbr.rel (%p201) target = $region58
        $region57: #{yolo_loss.1} parent=15 // pred_region
          %s204 = sand.u32 %s78, 1
          %s205 = sand.u32 %s78, 1
          %s206 = smul.addr %s205, 40
          %s207 = scalar_lea.vmem [#allocation6], %s206
          %s208 = sadd.s32 %s22, %s24
          %s209 = smul.addr %s23, 10
          %s210 = sadd.s32 %s208, %s209
          %s211 = smul.addr %s210, 8
          %s212 = scalar_lea.vmem %s2, %s211
          // Predicated region
          $region59: #{yolo_loss.1} parent=57 // pred_check
            _
          $region60: #{yolo_loss.1} parent=57 // pred_check_branch
            %214 = sbr.rel (0) target = $region62
          $region61: #{yolo_loss.1} parent=57 // pred_region
            // Predicated region
            $region63: #{yolo_loss.1} parent=61 // pred_check
              _
            $region64: #{yolo_loss.1} parent=61 // pred_check_branch
              %216 = sbr.rel (0) target = $region66
            $region65: #{yolo_loss.1} parent=61 // pred_region
              // Predicated region
              $region78: #{yolo_loss.1} parent=65 // pred_check
                _
              $region79: #{yolo_loss.1} parent=65 // pred_check_branch
                %239 = sbr.rel (0) target = $region81
              $region80: #{yolo_loss.1} parent=65 // pred_region
                loop: start=0, step=1, limit=1
                $region82: #{yolo_loss.1} parent=80 // loop_pre_header
                  _
                $region83: #{yolo_loss.1} parent=80 // loop_header
                  %s241 = sphi 0, %s245
                  %p242 = scmp.ge.s32.totalorder %s241, 1
                  %s246 = sphi %s212, %s212
                  %s247 = sphi %s207, %s207
                $region84: #{yolo_loss.1} parent=80 // loop_header_branch
                  %244 = sbr.rel (%p242) target = $region88
                $region85: #{yolo_loss.1} parent=80 // loop_body
                  %v248 = vld [vmem:[%s246] sm:$0xff]
                  %249 = vst [vmem:[%s247] sm:$0xff] %v248
                  %v250 = vld [vmem:[%s246 + $0x10] sm:$0xff]
                  %251 = vst [vmem:[%s247 + $0x8] sm:$0xff] %v250
                  %v252 = vld [vmem:[%s246 + $0x20] sm:$0xff]
                  %253 = vst [vmem:[%s247 + $0x10] sm:$0xff] %v252
                  %v254 = vld [vmem:[%s246 + $0x30] sm:$0xff]
                  %255 = vst [vmem:[%s247 + $0x18] sm:$0xff] %v254
                  %v256 = vld [vmem:[%s246 + $0x40] sm:$0xff]
                  %257 = vst [vmem:[%s247 + $0x20] sm:$0xff] %v256
                $region86: #{yolo_loss.1} parent=80 // loop_footer
                  %s245 = sadd.s32 1, %s241
                $region87: #{yolo_loss.1} parent=80 // loop_footer_branch
                  %240 = sbr.rel target = $region83
                $region88: #{yolo_loss.1} parent=80 // loop_exit
                  _
              $region81: #{yolo_loss.1} parent=65 // pred_fallthru
                _
              // Predicated region
              $region89: #{yolo_loss.1} parent=65 // pred_check
                _
              $region90: #{yolo_loss.1} parent=65 // pred_check_branch
                %259 = sbr.rel target = $region92
              $region91: #{yolo_loss.1} parent=65 // pred_region
                _
              $region92: #{yolo_loss.1} parent=65 // pred_fallthru
                _
            $region66: #{yolo_loss.1} parent=61 // pred_fallthru
              _
            // Predicated region
            $region67: #{yolo_loss.1} parent=61 // pred_check
              _
            $region68: #{yolo_loss.1} parent=61 // pred_check_branch
              %218 = sbr.rel target = $region70
            $region69: #{yolo_loss.1} parent=61 // pred_region
              loop: start=0, step=1, limit=1
              $region71: #{yolo_loss.1} parent=69 // loop_pre_header
                _
              $region72: #{yolo_loss.1} parent=69 // loop_header
                %s221 = sphi 0, %s225
                %p222 = scmp.ge.s32.totalorder %s221, 1
                %s226 = sphi %s212, %s212
                %s227 = sphi %s207, %s207
              $region73: #{yolo_loss.1} parent=69 // loop_header_branch
                %224 = sbr.rel (%p222) target = $region77
              $region74: #{yolo_loss.1} parent=69 // loop_body
                %v228 = vld [vmem:[%s226] sm:$0xff]
                %229 = vst [vmem:[%s227] sm:$0xff] %v228
                %v230 = vld [vmem:[%s226 + $0x10] sm:$0xff]
                %231 = vst [vmem:[%s227 + $0x8] sm:$0xff] %v230
                %v232 = vld [vmem:[%s226 + $0x20] sm:$0xff]
                %233 = vst [vmem:[%s227 + $0x10] sm:$0xff] %v232
                %v234 = vld [vmem:[%s226 + $0x30] sm:$0xff]
                %235 = vst [vmem:[%s227 + $0x18] sm:$0xff] %v234
                %v236 = vld [vmem:[%s226 + $0x40] sm:$0xff]
                %237 = vst [vmem:[%s227 + $0x20] sm:$0xff] %v236
              $region75: #{yolo_loss.1} parent=69 // loop_footer
                %s225 = sadd.s32 1, %s221
              $region76: #{yolo_loss.1} parent=69 // loop_footer_branch
                %220 = sbr.rel target = $region72
              $region77: #{yolo_loss.1} parent=69 // loop_exit
                _
            $region70: #{yolo_loss.1} parent=61 // pred_fallthru
              _
          $region62: #{yolo_loss.1} parent=57 // pred_fallthru
            _
          %260 = vnop
        $region58: #{yolo_loss.1} parent=15 // pred_fallthru
          _
      $region16: #{yolo_loss.1} parent=5 // pred_fallthru
        _
      %p261 = scmp.le.s32.totalorder 1, %s15
      %p262 = scmp.lt.s32.totalorder %s15, 7
      %p263 = pnand %p261, %p262
      %p264 = pneg %p263
      // Predicated region
      $region93: #{yolo_loss.1} parent=5 // pred_check
        _
      $region94: #{yolo_loss.1} parent=5 // pred_check_branch
        %266 = sbr.rel (%p263) target = $region96
      $region95: #{yolo_loss.1} parent=5 // pred_region
        %s267 = ssub.s32 %s15, 1
        %s268 = sand.u32 %s51, 1
        %s269 = sand.u32 %s51, 1
        %s270 = smul.addr %s269, 40
        %s271 = scalar_lea.vmem [#allocation5], %s270
        // Predicated region
        $region97: #{yolo_loss.1} parent=95 // pred_check
          %p272 = pneg %p64
        $region98: #{yolo_loss.1} parent=95 // pred_check_branch
          %274 = sbr.rel (%p272) target = $region100
        $region99: #{yolo_loss.1} parent=95 // pred_region
          _
        $region100: #{yolo_loss.1} parent=95 // pred_fallthru
          _
        %s275 = sand.u32 %s81, 1
        %s276 = sand.u32 %s81, 1
        %s277 = smul.addr %s276, 40
        %s278 = scalar_lea.vmem [#allocation6], %s277
        // Predicated region
        $region101: #{yolo_loss.1} parent=95 // pred_check
          %p279 = pneg %p94
        $region102: #{yolo_loss.1} parent=95 // pred_check_branch
          %281 = sbr.rel (%p279) target = $region104
        $region103: #{yolo_loss.1} parent=95 // pred_region
          _
        $region104: #{yolo_loss.1} parent=95 // pred_fallthru
          _
        %s282 = sand.u32 %s51, 1
        %s283 = sand.u32 %s51, 1
        %s284 = smul.addr %s283, 40
        %s285 = scalar_lea.vmem [#allocation5], %s284
        %p286 = pneg %p64
        %p287 = pneg %p61
        %s288 = sand.u32 %s81, 1
        %s289 = sand.u32 %s81, 1
        %s290 = smul.addr %s289, 40
        %s291 = scalar_lea.vmem [#allocation6], %s290
        %p292 = pneg %p94
        %p293 = pneg %p91
        %p294 = pneg %p122
        %p295 = pneg %p119
        %p296 = scmp.lt.s32.totalorder %s25, 1
        %s297 = scalar_select %p296, %s25, 1
        %p298 = scmp.lt.s32.totalorder %s26, 2
        %s299 = scalar_select %p298, %s26, 2
        %s300 = smul.addr %s297, 3
        %s301 = sadd.s32 %s299, %s300
        %s302 = smul.addr %s301, 8
        %s303 = scalar_lea.vmem %s3, %s302
        %s304 = sadd.s32 %s25, %s27
        %s305 = sadd.s32 %s25, %s27
        %p306 = scmp.lt.s32.totalorder %s25, 1
        %s307 = scalar_select %p306, %s25, 1
        %p308 = scmp.lt.s32.totalorder %s26, 2
        %s309 = scalar_select %p308, %s26, 2
        %s310 = smul.addr %s307, 3
        %s311 = sadd.s32 %s309, %s310
        %s312 = smul.addr %s311, 8
        %s313 = scalar_lea.vmem %s3, %s312
        %p314 = scmp.eq.s32.totalorder %s27, 0
        // Predicated region
        $region105: #{yolo_loss.1} parent=95 // pred_check
          %p315 = pneg %p314
        $region106: #{yolo_loss.1} parent=95 // pred_check_branch
          %317 = sbr.rel (%p315) target = $region108
        $region107: #{yolo_loss.1} parent=95 // pred_region
          %318 = vst [vmem:[#allocation2] sm:$0xff] 0.0
          %319 = vst [vmem:[#allocation2 + $0x8] sm:$0xff] 0.0
          %320 = vst [vmem:[#allocation2 + $0x10] sm:$0xff] 0.0
          %321 = vst [vmem:[#allocation2 + $0x18] sm:$0xff] 0.0
        $region108: #{yolo_loss.1} parent=95 // pred_fallthru
          _
        %s322 = smul.u32 %s26, 4
        %s323 = sld [smem:[#allocation4 + %s322]]
        %s324 = sadd.s32 %s322, 1
        %s325 = sld [smem:[#allocation4 + %s324]]
        %s326 = sadd.s32 %s322, 2
        %s327 = sld [smem:[#allocation4 + %s326]]
        %s328 = sadd.s32 %s322, 3
        %s329 = sld [smem:[#allocation4 + %s328]]
        %v330 = vstv %s323
        %v331 = vstv %s325
        %v332 = vstv %s327
        %v333 = vstv %s329
        %v334 = vld [vmem:[%s271] sm:$0xff]
        %v335 = vld [vmem:[%s271 + $0x8] sm:$0xff]
        %v336 = vld [vmem:[%s271 + $0x10] sm:$0xff]
        %v337 = vld [vmem:[%s271 + $0x18] sm:$0xff]
        %v338 = vld [vmem:[%s271 + $0x20] sm:$0xff]
        %v339 = vld [vmem:[%s278] sm:$0xff]
        %v340 = vld [vmem:[%s278 + $0x8] sm:$0xff]
        %v341 = vld [vmem:[%s278 + $0x10] sm:$0xff]
        %v342 = vld [vmem:[%s278 + $0x18] sm:$0xff]
        %v343 = vld [vmem:[%s278 + $0x20] sm:$0xff]
        %vm344 = vcmp.eq.f32.partialorder %v339, 1.0
        %v345 = vsel %vm344, 1, 0
        %v346 = vcvt.s32.f32 %v345
        %vm347 = vcmp.eq.f32.partialorder %v339, 0.0
        %v348 = vsel %vm347, 1, 0
        %v349 = vcvt.s32.f32 %v348
        %v350 = vand.u32 2147483647, %v334
        %v351 = vsub.f32 0.0, %v350
        %v352 = vmul.f32 %v351, 1.442695
        %v353 = vpow.pop %v352
        %v354 = vadd.f32 %v353, 1.0
        %v355 = vmax.f32 %v334, 0.0
        %v356 = vlog2.pop %v354
        %v357 = vmul.f32 %v356, 0.6931472
        %v358 = vadd.f32 %v355, %v357
        %v359 = vrcp.pop %v354
        %vm360 = vcmp.ge.f32.partialorder %v334, 0.0
        %v361 = vmul.f32 %v353, %v359
        %v362 = vsel %vm360, %v359, %v361
        %v363 = vmul.f32 %v335, 0.5
        %v364 = vtanh.pop %v363
        %v365 = vadd.f32 %v364, 1.0
        %v366 = vmul.f32 %v365, 0.5
        %v367 = vmul.f32 %v336, 0.5
        %v368 = vtanh.pop %v367
        %v369 = vadd.f32 %v368, 1.0
        %v370 = vmul.f32 %v369, 0.5
        %v371 = vmul.f32 %v337, 1.442695
        %v372 = vpow.pop %v371
        %v373 = vmul.f32 %v372, %v330
        %v374 = vmul.f32 %v338, 1.442695
        %v375 = vpow.pop %v374
        %v376 = vmul.f32 %v375, %v331
        %v377 = vmul.f32 %v373, 0.5
        %v378 = vsub.f32 %v366, %v377
        %v379 = vadd.f32 %v366, %v377
        %v380 = vmul.f32 %v376, 0.5
        %v381 = vsub.f32 %v370, %v380
        %v382 = vadd.f32 %v370, %v380
        %v383 = vmul.f32 %v342, 0.5
        %v384 = vsub.f32 %v340, %v383
        %v385 = vadd.f32 %v340, %v383
        %v386 = vmul.f32 %v343, 0.5
        %v387 = vsub.f32 %v341, %v386
        %v388 = vadd.f32 %v341, %v386
        %v389 = vmin.f32 %v379, %v385
        %v390 = vmax.f32 %v378, %v384
        %v391 = vsub.f32 %v389, %v390
        %v392 = vmax.f32 %v391, 0.0
        %v393 = vmin.f32 %v382, %v388
        %v394 = vmax.f32 %v381, %v387
        %v395 = vsub.f32 %v393, %v394
        %v396 = vmax.f32 %v395, 0.0
        %v397 = vmul.f32 %v392, %v396
        %v398 = vmul.f32 %v373, %v376
        %v399 = vand.u32 2147483647, %v398
        %v400 = vmul.f32 %v342, %v343
        %v401 = vand.u32 2147483647, %v400
        %v402 = vadd.f32 %v399, %v401
        %v403 = vsub.f32 %v402, %v397
        %v404 = vadd.f32 %v403, 1e-06
        %v405 = vrcp.pop %v404
        %v406 = vmul.f32 %v397, %v405
        %v407 = vsub.f32 %v362, %v406
        %v408 = vmul.f32 %v407, %v407
        %v409 = vmul.f32 %v342, %v332
        %v410 = vadd.f32 %v409, 1e-16
        %v411 = vlog2.pop %v410
        %v412 = vmul.f32 %v411, 0.6931472
        %v413 = vmul.f32 %v343, %v333
        %v414 = vadd.f32 %v413, 1e-16
        %v415 = vlog2.pop %v414
        %v416 = vmul.f32 %v415, 0.6931472
        %v417 = vsub.f32 %v366, %v340
        %v418 = vmul.f32 %v417, %v417
        %v419 = vsub.f32 %v370, %v341
        %v420 = vmul.f32 %v419, %v419
        %v421 = vadd.f32 %v418, %v420
        %v422 = vsub.f32 %v337, %v412
        %v423 = vmul.f32 %v422, %v422
        %v424 = vadd.f32 %v421, %v423
        %v425 = vsub.f32 %v338, %v416
        %v426 = vmul.f32 %v425, %v425
        %v427 = vadd.f32 %v424, %v426
        %v428 = vmul.f32 %v358, %v349
        %v429 = vadd.f32 %v428, 0.0
        %v430 = vadd.f32 %v349, 0.0
        %v431 = vadd.f32 %v346, 0.0
        %v432 = vmul.f32 %v427, 0.25
        %v433 = vadd.f32 %v408, %v432
        %v434 = vmul.f32 %v433, %v346
        %v435 = vadd.f32 %v434, 0.0
        %v436 = vld [vmem:[#allocation2] sm:$0xff]
        %v437 = vadd.f32 %v436, %v429
        %438 = vst [vmem:[#allocation2] sm:$0xff] %v437
        %v439 = vld [vmem:[#allocation2 + $0x8] sm:$0xff]
        %v440 = vadd.f32 %v439, %v430
        %441 = vst [vmem:[#allocation2 + $0x8] sm:$0xff] %v440
        %v442 = vld [vmem:[#allocation2 + $0x10] sm:$0xff]
        %v443 = vadd.f32 %v442, %v431
        %444 = vst [vmem:[#allocation2 + $0x10] sm:$0xff] %v443
        %v445 = vld [vmem:[#allocation2 + $0x18] sm:$0xff]
        %v446 = vadd.f32 %v445, %v435
        %447 = vst [vmem:[#allocation2 + $0x18] sm:$0xff] %v446
        // Predicated region
        $region109: #{yolo_loss.1} parent=95 // pred_check
          %p448 = pneg %p314
        $region110: #{yolo_loss.1} parent=95 // pred_check_branch
          %450 = sbr.rel (%p448) target = $region112
        $region111: #{yolo_loss.1} parent=95 // pred_region
          %v451 = vld [vmem:[#allocation2] sm:$0xff]
          %452 = vadd.xlane.f32.xlu0 %v451
          %v453 = vpop.xlane.xlu0 %452
          %v454 = vrot.slane %v453, 4
          %v455 = vadd.f32 %v453, %v454
          %v456 = vrot.slane %v455, 2
          %v457 = vadd.f32 %v455, %v456
          %v458 = vrot.slane %v457, 1
          %v459 = vadd.f32 %v457, %v458
          %s460 = vtos %v459
          %v461 = vld [vmem:[#allocation2 + $0x8] sm:$0xff]
          %462 = vadd.xlane.f32.xlu0 %v461
          %v463 = vpop.xlane.xlu0 %462
          %v464 = vrot.slane %v463, 4
          %v465 = vadd.f32 %v463, %v464
          %v466 = vrot.slane %v465, 2
          %v467 = vadd.f32 %v465, %v466
          %v468 = vrot.slane %v467, 1
          %v469 = vadd.f32 %v467, %v468
          %s470 = vtos %v469
          %v471 = vld [vmem:[#allocation2 + $0x10] sm:$0xff]
          %472 = vadd.xlane.f32.xlu0 %v471
          %v473 = vpop.xlane.xlu0 %472
          %v474 = vrot.slane %v473, 4
          %v475 = vadd.f32 %v473, %v474
          %v476 = vrot.slane %v475, 2
          %v477 = vadd.f32 %v475, %v476
          %v478 = vrot.slane %v477, 1
          %v479 = vadd.f32 %v477, %v478
          %s480 = vtos %v479
          %v481 = vld [vmem:[#allocation2 + $0x18] sm:$0xff]
          %482 = vadd.xlane.f32.xlu0 %v481
          %v483 = vpop.xlane.xlu0 %482
          %v484 = vrot.slane %v483, 4
          %v485 = vadd.f32 %v483, %v484
          %v486 = vrot.slane %v485, 2
          %v487 = vadd.f32 %v485, %v486
          %v488 = vrot.slane %v487, 1
          %v489 = vadd.f32 %v487, %v488
          %s490 = vtos %v489
          %v491 = vlaneseq
          %v492 = vshrl.u32 %v491, 7
          %vm493 = vcmp.eq.s32.totalorder %v492, 0
          %vm494 = vcmp.eq.s32.totalorder %v492, 1
          %vm495 = vcmp.eq.s32.totalorder %v492, 2
          %vm496 = vcmp.eq.s32.totalorder %v492, 3
          %v497 = vstv %s490
          %v498 = vsel %vm496, %v497, 0.0
          %v499 = vstv %s480
          %v500 = vsel %vm495, %v499, %v498
          %v501 = vstv %s470
          %v502 = vsel %vm494, %v501, %v500
          %v503 = vstv %s460
          %v504 = vsel %vm493, %v503, %v502
          %505 = vst [vmem:[%s313] sm:$0xff] %v504
        $region112: #{yolo_loss.1} parent=95 // pred_fallthru
          _
        %p506 = scmp.lt.s32.totalorder %s25, 1
        %s507 = scalar_select %p506, %s25, 1
        %p508 = scmp.lt.s32.totalorder %s26, 2
        %s509 = scalar_select %p508, %s26, 2
        %s510 = smul.addr %s507, 3
        %s511 = sadd.s32 %s509, %s510
        %s512 = smul.addr %s511, 8
        %s513 = scalar_lea.vmem %s3, %s512
        // Predicated region
        $region113: #{yolo_loss.1} parent=95 // pred_check
          %p514 = pneg %p119
        $region114: #{yolo_loss.1} parent=95 // pred_check_branch
          %516 = sbr.rel (%p514) target = $region116
        $region115: #{yolo_loss.1} parent=95 // pred_region
          _
        $region116: #{yolo_loss.1} parent=95 // pred_fallthru
          _
      $region96: #{yolo_loss.1} parent=5 // pred_fallthru
        _
      %p517 = scmp.le.s32.totalorder 2, %s15
      // Predicated region
      $region117: #{yolo_loss.1} parent=5 // pred_check
        %p518 = pneg %p517
      $region118: #{yolo_loss.1} parent=5 // pred_check_branch
        %520 = sbr.rel (%p518) target = $region120
      $region119: #{yolo_loss.1} parent=5 // pred_region
        %s521 = ssub.s32 %s15, 2
        // Predicated region
        $region121: #{yolo_loss.1} parent=119 // pred_check
          %p522 = pneg %p125
        $region122: #{yolo_loss.1} parent=119 // pred_check_branch
          %524 = sbr.rel (%p522) target = $region124
        $region123: #{yolo_loss.1} parent=119 // pred_region
          %p525 = scmp.lt.s32.totalorder %s28, 1
          %s526 = scalar_select %p525, %s28, 1
          %p527 = scmp.lt.s32.totalorder %s29, 2
          %s528 = scalar_select %p527, %s29, 2
          %s529 = smul.addr %s526, 3
          %s530 = sadd.s32 %s528, %s529
          %s531 = smul.addr %s530, 8
          %s532 = scalar_lea.vmem %s3, %s531
        $region124: #{yolo_loss.1} parent=119 // pred_fallthru
          _
      $region120: #{yolo_loss.1} parent=5 // pred_fallthru
        _
    $region6: #{yolo_loss.1} parent=1 // loop_footer
      %s19 = sadd.s32 1, %s15
    $region7: #{yolo_loss.1} parent=1 // loop_footer_branch
      %14 = sbr.rel target = $region3
    $region8: #{yolo_loss.1} parent=1 // loop_exit
      _

</llo_original>
